<compile_context>
chip_gen: v5e
topology: v5e:2x2
jax: 0.10.0
libtpu: 0.0.40
codegen_flags: <defaults>
</compile_context>

<pallas_src>
import functools

import jax
import jax.numpy as jnp
from jax.experimental import pallas as pl
from jax.experimental.pallas import tpu as pltpu


def _round_up(x, m):
    return (x + m - 1) // m * m


def _vmem_limit_bytes():
    # Stay well below physical VMEM (64 MiB/TC on v7x, 128 MiB on v5e/v6e) so
    # Pallas double buffers and Mosaic internal scratch still fit.
    try:
        cap = int(pltpu.get_tpu_info().vmem_capacity_bytes)
    except Exception:
        cap = 64 << 20  # conservative (v7x per-TensorCore)
    return int(min(cap * 3 // 4, 96 << 20))


def _patch_embed_kernel(p_ref, w_ref, b_ref, act_ref, s1_ref, s2_ref,
                        *, tm, nm, tail_valid):
    """Conv-as-matmul (bf16 in, f32 acc) + bias + exact GELU + partial stats."""
    y = jnp.dot(p_ref[...], w_ref[...], preferred_element_type=jnp.float32)
    y = y + b_ref[...]                                    # (TM, Cpad) + (1, Cpad)

    # Exact GELU (PyTorch nn.GELU default): 0.5*x*(1+erf(x/sqrt(2))).
    # TODO(synk): switch to tanh-approx GELU (EUP slot) only if the accuracy
    # budget explicitly allows deviating from nn.GELU's erf default.
    act = 0.5 * y * (1.0 + jax.lax.erf(y * jnp.float32(0.7071067811865476)))

    act_ref[...] = act.astype(act_ref.dtype)              # bf16 HBM writeback

    cpad = act.shape[1]

    def _partial_sums(a):
        # Group-of-8 partial reduction keeps an (8, Cpad) full-vreg output
        # block (no sublane reduce); the remaining 8-row + cross-tile sum is
        # O(nm*8*Cout) JAX glue.
        g = a.reshape(tm // 8, 8, cpad)
        s1_ref[...] = jnp.sum(g, axis=0)
        s2_ref[...] = jnp.sum(g * g, axis=0)

    if tail_valid == tm:          # static: M divides evenly, never mask
        _partial_sums(act)
    else:                         # static: only the last tile has padded rows
        i = pl.program_id(0)

        @pl.when(i != nm - 1)
        def _():
            _partial_sums(act)

        @pl.when(i == nm - 1)
        def _():
            row = jax.lax.broadcasted_iota(jnp.int32, (tm, 1), 0)
            _partial_sums(jnp.where(row < tail_valid, act, 0.0))


def patch_embedding_conv(x_nchw, conv_w, conv_b, bn_gamma, bn_beta,
                         *, patch_size, eps=1e-5):
    """Forward of PatchEmbeddingConv.

    x_nchw: (N, Cin, H, W) f32; conv_w: (Cout, Cin, P, P); conv_b/bn_*: (Cout,)
    returns: (N, Cout, H//P, W//P) f32
    """
    N, Cin, H, W = x_nchw.shape
    Cout = conv_w.shape[0]
    P = patch_size
    assert H % P == 0 and W % P == 0
    Hp, Wp = H // P, W // P
    M = N * Hp * Wp
    K = Cin * P * P

    # Padded / tiled problem sizes (lane-dense, MXU-aligned).
    Kpad = _round_up(K, 128)
    Cpad = _round_up(Cout, 128)

    # M tiling: big tiles (fewer grid steps), sized to minimize last-tile
    # padding; multiples of 16 keep bf16 sublane packing happy.
    TM_MAX = 1024
    if M <= TM_MAX:
        TM = _round_up(M, 16)
    else:
        n_tiles = (M + TM_MAX - 1) // TM_MAX
        TM = _round_up((M + n_tiles - 1) // n_tiles, 16)
    Mpad = _round_up(M, TM)
    nm = Mpad // TM
    tail_valid = M - (nm - 1) * TM

    # --- XLA glue: NCHW -> zero-padded bf16 patch matrix (Mpad, Kpad),
    # channel-major within a patch (matches PyTorch (Cout,Cin,P,P) flattening).
    # TODO(synk): accept NHWC at the module boundary (or DMA (Cin,P,P) strips
    # manually) to remove this extra HBM round trip / 6-D transpose.
    patches = x_nchw.reshape(N, Cin, Hp, P, Wp, P)
    patches = patches.transpose(0, 2, 4, 1, 3, 5).reshape(M, K)
    patches = jnp.pad(patches, ((0, Mpad - M), (0, Kpad - K)))
    patches = patches.astype(jnp.bfloat16)            # bf16 MXU operands, f32 acc

    wT = conv_w.reshape(Cout, K).T                      # (K, Cout)
    wT = jnp.pad(wT, ((0, Kpad - K), (0, Cpad - Cout))).astype(jnp.bfloat16)
    b2 = jnp.pad(conv_b.astype(jnp.float32), (0, Cpad - Cout)).reshape(1, Cpad)

    kernel = functools.partial(_patch_embed_kernel,
                               tm=TM, nm=nm, tail_valid=tail_valid)

    act, s1, s2 = pl.pallas_call(
        kernel,
        out_shape=(
            jax.ShapeDtypeStruct((Mpad, Cpad), jnp.bfloat16),   # GELU(conv) act
            jax.ShapeDtypeStruct((nm * 8, Cpad), jnp.float32),  # partial sum
            jax.ShapeDtypeStruct((nm * 8, Cpad), jnp.float32),  # partial sumsq
        ),
        grid_spec=pltpu.PrefetchScalarGridSpec(
            num_scalar_prefetch=0,
            grid=(nm,),
            in_specs=[
                pl.BlockSpec((TM, Kpad), lambda i: (i, 0)),     # patches: 1 DMA each
                pl.BlockSpec((Kpad, Cpad), lambda i: (0, 0)),   # weight: resident
                pl.BlockSpec((1, Cpad), lambda i: (0, 0)),      # bias:   resident
            ],
            out_specs=(
                pl.BlockSpec((TM, Cpad), lambda i: (i, 0)),     # act tile (bf16)
                pl.BlockSpec((8, Cpad), lambda i: (i, 0)),      # per-tile s1
                pl.BlockSpec((8, Cpad), lambda i: (i, 0)),      # per-tile s2
            ),
        ),
        compiler_params=pltpu.CompilerParams(
            dimension_semantics=("parallel",),   # megacore-shards M on v7x
            vmem_limit_bytes=_vmem_limit_bytes()),
    )(patches, wT, b2)

    # --- O(Cout) glue: fold train-mode BatchNorm into per-channel scale/shift.
    s1_tot = jnp.sum(s1, axis=0)[:Cout]
    s2_tot = jnp.sum(s2, axis=0)[:Cout]
    mean = s1_tot / M
    var = jnp.maximum(s2_tot / M - mean * mean, 0.0)     # biased variance
    scale = bn_gamma.astype(jnp.float32) * jax.lax.rsqrt(var + eps)
    shift = bn_beta.astype(jnp.float32) - mean * scale

    # --- Per-channel FMA + layout epilogue as plain JAX: XLA fuses the FMA
    # into the slice + NCHW transpose (no extra memory-bound Pallas pass).
    out = act[:M, :Cout].astype(jnp.float32) * scale + shift
    out = out.reshape(N, Hp, Wp, Cout).transpose(0, 3, 1, 2)
    return out


def _reference(x, w, b, g, be, *, patch_size, eps=1e-5,
               matmul_dtype=None, act_dtype=None):
    """Pure-JAX reference.  matmul_dtype/act_dtype mimic the kernel precision."""
    if matmul_dtype is not None:
        xc, wc = x.astype(matmul_dtype), w.astype(matmul_dtype)
    else:
        xc, wc = x, w
    y = jax.lax.conv_general_dilated(
        xc, wc, window_strides=(patch_size, patch_size), padding="VALID",
        dimension_numbers=("NCHW", "OIHW", "NCHW"),
        preferred_element_type=jnp.float32)
    y = y + b.reshape(1, -1, 1, 1)
    y = 0.5 * y * (1.0 + jax.lax.erf(y / jnp.sqrt(2.0)))
    mean = jnp.mean(y, axis=(0, 2, 3), keepdims=True)            # stats in f32
    var = jnp.mean((y - mean) ** 2, axis=(0, 2, 3), keepdims=True)
    if act_dtype is not None:                                    # bf16 writeback
        y = y.astype(act_dtype).astype(jnp.float32)
    y = (y - mean) * jax.lax.rsqrt(var + eps)
    return y * g.reshape(1, -1, 1, 1) + be.reshape(1, -1, 1, 1)


if __name__ == "__main__":
    # Small shapes consistent with the module: batch=2, Cin=4, H=W=16, P=8, Cout=32
    N, Cin, H, W = 2, 4, 16, 16
    P = 8
    Cout = 32

    key = jax.random.PRNGKey(0)
    kx, kw, kb = jax.random.split(key, 3)

    x = jax.random.normal(kx, (N, Cin, H, W), dtype=jnp.float32)

    # Deterministic parameter init (Conv2d-like uniform fan-in scaling)
    fan_in = Cin * P * P
    bound = 1.0 / float(jnp.sqrt(jnp.float32(fan_in)))
    conv_w = jax.random.uniform(kw, (Cout, Cin, P, P), jnp.float32, -bound, bound)
    conv_b = jax.random.uniform(kb, (Cout,), jnp.float32, -bound, bound)
    bn_gamma = jnp.ones((Cout,), jnp.float32)   # BatchNorm2d default init
    bn_beta = jnp.zeros((Cout,), jnp.float32)

    fwd = jax.jit(functools.partial(patch_embedding_conv, patch_size=P))
    out = jax.block_until_ready(fwd(x, conv_w, conv_b, bn_gamma, bn_beta))

    assert out.shape == (N, Cout, H // P, W // P), out.shape
    assert bool(jnp.all(jnp.isfinite(out)))

    # Tight check: reference run at the kernel's precision (bf16 MXU operands,
    # f32 accumulate + f32 batch stats, bf16 activation writeback).
    ref_mimic = _reference(x, conv_w, conv_b, bn_gamma, bn_beta, patch_size=P,
                           matmul_dtype=jnp.bfloat16, act_dtype=jnp.bfloat16)
    err_mimic = float(jnp.max(jnp.abs(out - ref_mimic)))
    assert jnp.allclose(out, ref_mimic, atol=2e-3, rtol=2e-3), err_mimic

    # Loose check vs the full-f32 PyTorch-semantics reference (bf16 rounding only).
    ref_f32 = _reference(x, conv_w, conv_b, bn_gamma, bn_beta, patch_size=P)
    err_f32 = float(jnp.max(jnp.abs(out - ref_f32)))
    assert jnp.allclose(out, ref_f32, atol=1e-1, rtol=1e-1), err_f32

    print("KERNEL_OK")
</pallas_src>

<mosaic_0001>
module attributes {stable_mosaic.version = 11 : i64} {
  func.func @_patch_embed_kernel(%arg0: i32, %arg1: memref<16x256xbf16, #tpu.memory_space<vmem>>, %arg2: memref<256x128xbf16, #tpu.memory_space<vmem>>, %arg3: memref<1x128xf32, #tpu.memory_space<vmem>>, %arg4: memref<16x128xbf16, #tpu.memory_space<vmem>>, %arg5: memref<8x128xf32, #tpu.memory_space<vmem>>, %arg6: memref<8x128xf32, #tpu.memory_space<vmem>>) attributes {dimension_semantics = [#tpu.dimension_semantics<parallel>], iteration_bounds = array<i64: 1>, scalar_prefetch = 0 : i64, scratch_operands = 0 : i64, tpu.core_type = #tpu.core_type<tc>, window_params = [{transform_indices = @transform_0, window_bounds = array<i64: 16, 256>}, {pipeline_mode = #tpu.pipeline_mode<synchronous>, transform_indices = @transform_1, window_bounds = array<i64: 256, 128>}, {pipeline_mode = #tpu.pipeline_mode<synchronous>, transform_indices = @transform_2, window_bounds = array<i64: 1, 128>}, {transform_indices = @transform_3, window_bounds = array<i64: 16, 128>}, {transform_indices = @transform_4, window_bounds = array<i64: 8, 128>}, {transform_indices = @transform_5, window_bounds = array<i64: 8, 128>}]} {
    %c0 = arith.constant 0 : index
    %c0_0 = arith.constant 0 : index
    %0 = vector.load %arg1[%c0, %c0_0] : memref<16x256xbf16, #tpu.memory_space<vmem>>, vector<16x256xbf16>
    %c0_1 = arith.constant 0 : index
    %c0_2 = arith.constant 0 : index
    %1 = vector.load %arg2[%c0_1, %c0_2] : memref<256x128xbf16, #tpu.memory_space<vmem>>, vector<256x128xbf16>
    %cst = arith.constant dense<0.000000e+00> : vector<16x128xf32>
    %2 = tpu.matmul %0, %1, %cst {dimension_numbers = #tpu.dot_dimension_numbers<[1], [0], [0], [1], [0, 0, 1, 1], [], []>} : vector<16x256xbf16>, vector<256x128xbf16>, vector<16x128xf32> -> vector<16x128xf32>
    %c0_3 = arith.constant 0 : index
    %c0_4 = arith.constant 0 : index
    %3 = vector.load %arg3[%c0_3, %c0_4] : memref<1x128xf32, #tpu.memory_space<vmem>>, vector<1x128xf32>
    %4 = vector.broadcast %3 : vector<1x128xf32> to vector<16x128xf32>
    %5 = arith.addf %2, %4 : vector<16x128xf32>
    %cst_5 = arith.constant 5.000000e-01 : f32
    %6 = vector.broadcast %cst_5 : f32 to vector<16x128xf32>
    %7 = arith.mulf %6, %5 : vector<16x128xf32>
    %cst_6 = arith.constant 0.707106769 : f32
    %8 = vector.broadcast %cst_6 : f32 to vector<16x128xf32>
    %9 = arith.mulf %5, %8 : vector<16x128xf32>
    %10 = math.erf %9 : vector<16x128xf32>
    %cst_7 = arith.constant 1.000000e+00 : f32
    %11 = vector.broadcast %cst_7 : f32 to vector<16x128xf32>
    %12 = arith.addf %11, %10 : vector<16x128xf32>
    %13 = arith.mulf %7, %12 : vector<16x128xf32>
    %14 = arith.truncf %13 : vector<16x128xf32> to vector<16x128xbf16>
    %c0_8 = arith.constant 0 : index
    %c0_9 = arith.constant 0 : index
    %15 = vector.load %arg4[%c0_8, %c0_9] : memref<16x128xbf16, #tpu.memory_space<vmem>>, vector<16x128xbf16>
    tpu.vector_store %arg4[%c0_8, %c0_9], %14 {strides = array<i32>} : memref<16x128xbf16, #tpu.memory_space<vmem>>, vector<16x128xbf16>,
    %c0_i32 = arith.constant 0 : i32
    %16 = arith.cmpi ne, %arg0, %c0_i32 : i32
    %17 = arith.extui %16 : i1 to i32
    %c0_i32_10 = arith.constant 0 : i32
    %18 = arith.cmpi ne, %17, %c0_i32_10 : i32
    scf.if %18 {
      %22 = vector.shape_cast %13 : vector<16x128xf32> to vector<2x8x128xf32>
      %cst_13 = arith.constant dense<0.000000e+00> : vector<8x128xf32>
      %23 = vector.multi_reduction <add>, %22, %cst_13 [0] : vector<2x8x128xf32> to vector<8x128xf32>
      %c0_14 = arith.constant 0 : index
      %c0_15 = arith.constant 0 : index
      %24 = vector.load %arg5[%c0_14, %c0_15] : memref<8x128xf32, #tpu.memory_space<vmem>>, vector<8x128xf32>
      tpu.vector_store %arg5[%c0_14, %c0_15], %23 {strides = array<i32>} : memref<8x128xf32, #tpu.memory_space<vmem>>, vector<8x128xf32>,
      %25 = arith.mulf %22, %22 : vector<2x8x128xf32>
      %cst_16 = arith.constant dense<0.000000e+00> : vector<8x128xf32>
      %26 = vector.multi_reduction <add>, %25, %cst_16 [0] : vector<2x8x128xf32> to vector<8x128xf32>
      %c0_17 = arith.constant 0 : index
      %c0_18 = arith.constant 0 : index
      %27 = vector.load %arg6[%c0_17, %c0_18] : memref<8x128xf32, #tpu.memory_space<vmem>>, vector<8x128xf32>
      tpu.vector_store %arg6[%c0_17, %c0_18], %26 {strides = array<i32>} : memref<8x128xf32, #tpu.memory_space<vmem>>, vector<8x128xf32>,
    } else {
    }
    %c0_i32_11 = arith.constant 0 : i32
    %19 = arith.cmpi eq, %arg0, %c0_i32_11 : i32
    %20 = arith.extui %19 : i1 to i32
    %c0_i32_12 = arith.constant 0 : i32
    %21 = arith.cmpi ne, %20, %c0_i32_12 : i32
    scf.if %21 {
      %22 = tpu.iota {dimensions = array<i32: 0>} : vector<16x1xi32>
      %c8_i32 = arith.constant 8 : i32
      %23 = vector.broadcast %c8_i32 : i32 to vector<16x1xi32>
      %24 = arith.cmpi slt, %22, %23 : vector<16x1xi32>
      %cst_13 = arith.constant 0.000000e+00 : f32
      %25 = vector.shape_cast %24 : vector<16x1xi1> to vector<16x1xi1>
      %26 = vector.broadcast %25 : vector<16x1xi1> to vector<16x128xi1>
      %27 = vector.broadcast %cst_13 : f32 to vector<16x128xf32>
      %28 = arith.select %26, %13, %27 : vector<16x128xi1>, vector<16x128xf32>
      %29 = vector.shape_cast %28 : vector<16x128xf32> to vector<2x8x128xf32>
      %cst_14 = arith.constant dense<0.000000e+00> : vector<8x128xf32>
      %30 = vector.multi_reduction <add>, %29, %cst_14 [0] : vector<2x8x128xf32> to vector<8x128xf32>
      %c0_15 = arith.constant 0 : index
      %c0_16 = arith.constant 0 : index
      %31 = vector.load %arg5[%c0_15, %c0_16] : memref<8x128xf32, #tpu.memory_space<vmem>>, vector<8x128xf32>
      tpu.vector_store %arg5[%c0_15, %c0_16], %30 {strides = array<i32>} : memref<8x128xf32, #tpu.memory_space<vmem>>, vector<8x128xf32>,
      %32 = arith.mulf %29, %29 : vector<2x8x128xf32>
      %cst_17 = arith.constant dense<0.000000e+00> : vector<8x128xf32>
      %33 = vector.multi_reduction <add>, %32, %cst_17 [0] : vector<2x8x128xf32> to vector<8x128xf32>
      %c0_18 = arith.constant 0 : index
      %c0_19 = arith.constant 0 : index
      %34 = vector.load %arg6[%c0_18, %c0_19] : memref<8x128xf32, #tpu.memory_space<vmem>>, vector<8x128xf32>
      tpu.vector_store %arg6[%c0_18, %c0_19], %33 {strides = array<i32>} : memref<8x128xf32, #tpu.memory_space<vmem>>, vector<8x128xf32>,
    } else {
    }
    return
  }
  func.func @transform_0(%arg0: i32) -> (i32, i32) {
    %c0_i32 = arith.constant 0 : i32
    %c0_i32_0 = arith.constant 0 : i32
    return %arg0, %c0_i32 : i32, i32
  }
  func.func @transform_1(%arg0: i32) -> (i32, i32) {
    %c0_i32 = arith.constant 0 : i32
    %c0_i32_0 = arith.constant 0 : i32
    %c0_i32_1 = arith.constant 0 : i32
    return %c0_i32, %c0_i32_0 : i32, i32
  }
  func.func @transform_2(%arg0: i32) -> (i32, i32) {
    %c0_i32 = arith.constant 0 : i32
    %c0_i32_0 = arith.constant 0 : i32
    %c0_i32_1 = arith.constant 0 : i32
    return %c0_i32, %c0_i32_0 : i32, i32
  }
  func.func @transform_3(%arg0: i32) -> (i32, i32) {
    %c0_i32 = arith.constant 0 : i32
    %c0_i32_0 = arith.constant 0 : i32
    return %arg0, %c0_i32 : i32, i32
  }
  func.func @transform_4(%arg0: i32) -> (i32, i32) {
    %c0_i32 = arith.constant 0 : i32
    %c0_i32_0 = arith.constant 0 : i32
    return %arg0, %c0_i32 : i32, i32
  }
  func.func @transform_5(%arg0: i32) -> (i32, i32) {
    %c0_i32 = arith.constant 0 : i32
    %c0_i32_0 = arith.constant 0 : i32
    return %arg0, %c0_i32 : i32, i32
  }
}

</mosaic_0001>

<llo_original>
// kernel: patch_embedding_conv.1
$region0: #{patch_embedding_conv.1}
  #allocation0 [shape = 'u32[]', space=smem, size = 0x4, offset = 0x4, fixed_abs, tag = 'smem constant byte address 0x4 - core index']
  #allocation1 [shape = 'u32[72,128]{1,0:T(1,128)}', space=vmem, size = 0x9000, scoped, tag = 'internal scratch']
  %s0 = inlined_call_operand.vmem [shape: bf16[16,256], index: 0, kind: input, shape index: {}]
  %s1 = inlined_call_operand.vmem [shape: bf16[256,128], index: 1, kind: input, shape index: {}]
  %s2 = inlined_call_operand.vmem [shape: f32[1,128], index: 2, kind: input, shape index: {}]
  %s3 = inlined_call_operand.vmem [shape: bf16[16,128], index: 3, kind: output, shape index: {0}]
  %s4 = inlined_call_operand.vmem [shape: f32[8,128], index: 4, kind: output, shape index: {1}]
  %s5 = inlined_call_operand.vmem [shape: f32[8,128], index: 5, kind: output, shape index: {2}]
  %6 = xla_tuple %s3, %s4, %s5
  %s7 = sld [smem:[#allocation0]]
  $region46: #{patch_embedding_conv.1} parent=0
    _
  %s9 = ssub.s32 1, %s7
  %s10 = scalar_select 0, %s9, %s7
  // Predicated region
  $region2: #{patch_embedding_conv.1} parent=0 // pred_check
    _
  $region3: #{patch_embedding_conv.1} parent=0 // pred_check_branch
    %12 = sbr.rel (0) target = $region5
  $region4: #{patch_embedding_conv.1} parent=0 // pred_region
    _
  $region5: #{patch_embedding_conv.1} parent=0 // pred_fallthru
    _
  // Predicated region
  $region6: #{patch_embedding_conv.1} parent=0 // pred_check
    _
  $region7: #{patch_embedding_conv.1} parent=0 // pred_check_branch
    %14 = sbr.rel (0) target = $region9
  $region8: #{patch_embedding_conv.1} parent=0 // pred_region
    _
  $region9: #{patch_embedding_conv.1} parent=0 // pred_fallthru
    _
  // Predicated region
  $region10: #{patch_embedding_conv.1} parent=0 // pred_check
    _
  $region11: #{patch_embedding_conv.1} parent=0 // pred_check_branch
    %16 = sbr.rel (0) target = $region13
  $region12: #{patch_embedding_conv.1} parent=0 // pred_region
    _
  $region13: #{patch_embedding_conv.1} parent=0 // pred_fallthru
    _
  %v17 = vld [vmem:[%s0] sm:$0xff]
  %v18 = vld [vmem:[%s0 + $0x8] sm:$0xff]
  %v19 = vld [vmem:[%s1] sm:$0xf]
  %v20 = vld [vmem:[%s1 + $0x4] sm:$0xf]
  %v21 = vld [vmem:[%s1 + $0x8] sm:$0xf]
  %v22 = vld [vmem:[%s1 + $0xc] sm:$0xf]
  %v23 = vld [vmem:[%s1 + $0x10] sm:$0xf]
  %v24 = vld [vmem:[%s1 + $0x14] sm:$0xf]
  %v25 = vld [vmem:[%s1 + $0x18] sm:$0xf]
  %v26 = vld [vmem:[%s1 + $0x1c] sm:$0xf]
  %v27 = vld [vmem:[%s1 + $0x20] sm:$0xf]
  %v28 = vld [vmem:[%s1 + $0x24] sm:$0xf]
  %v29 = vld [vmem:[%s1 + $0x28] sm:$0xf]
  %v30 = vld [vmem:[%s1 + $0x2c] sm:$0xf]
  %v31 = vld [vmem:[%s1 + $0x30] sm:$0xf]
  %v32 = vld [vmem:[%s1 + $0x34] sm:$0xf]
  %v33 = vld [vmem:[%s1 + $0x38] sm:$0xf]
  %v34 = vld [vmem:[%s1 + $0x3c] sm:$0xf]
  %v35 = vld [vmem:[%s1 + $0x40] sm:$0xf]
  %v36 = vld [vmem:[%s1 + $0x44] sm:$0xf]
  %v37 = vld [vmem:[%s1 + $0x48] sm:$0xf]
  %v38 = vld [vmem:[%s1 + $0x4c] sm:$0xf]
  %v39 = vld [vmem:[%s1 + $0x50] sm:$0xf]
  %v40 = vld [vmem:[%s1 + $0x54] sm:$0xf]
  %v41 = vld [vmem:[%s1 + $0x58] sm:$0xf]
  %v42 = vld [vmem:[%s1 + $0x5c] sm:$0xf]
  %v43 = vld [vmem:[%s1 + $0x60] sm:$0xf]
  %v44 = vld [vmem:[%s1 + $0x64] sm:$0xf]
  %v45 = vld [vmem:[%s1 + $0x68] sm:$0xf]
  %v46 = vld [vmem:[%s1 + $0x6c] sm:$0xf]
  %v47 = vld [vmem:[%s1 + $0x70] sm:$0xf]
  %v48 = vld [vmem:[%s1 + $0x74] sm:$0xf]
  %v49 = vld [vmem:[%s1 + $0x78] sm:$0xf]
  %v50 = vld [vmem:[%s1 + $0x7c] sm:$0xf]
  %v51 = vld [vmem:[%s2] sm:$0x1]
  %v53 = vperm.slane %v51, 0
  %v57 = vunpack.c.l.b16 %v17
  %v58 = vunpack.c.h.b16 %v17
  %v59 = vunpack.c.l.b16 %v18
  %v60 = vunpack.c.h.b16 %v18
  %v61 = vpack.c.b16 %v59, %v57
  %v62 = vpack.c.b16 %v60, %v58
  %v97 = vunpack.c.l.b16 %v19
  %v98 = vunpack.c.l.b16 %v20
  %v99 = vunpack.c.l.b16 %v21
  %v100 = vunpack.c.l.b16 %v22
  %v101 = vunpack.c.l.b16 %v23
  %v102 = vunpack.c.l.b16 %v24
  %v103 = vunpack.c.l.b16 %v25
  %v104 = vunpack.c.l.b16 %v26
  %v105 = vunpack.c.l.b16 %v27
  %v106 = vunpack.c.l.b16 %v28
  %v107 = vunpack.c.l.b16 %v29
  %v108 = vunpack.c.l.b16 %v30
  %v109 = vunpack.c.l.b16 %v31
  %v110 = vunpack.c.l.b16 %v32
  %v111 = vunpack.c.l.b16 %v33
  %v112 = vunpack.c.l.b16 %v34
  %v113 = vunpack.c.l.b16 %v35
  %v114 = vunpack.c.l.b16 %v36
  %v115 = vunpack.c.l.b16 %v37
  %v116 = vunpack.c.l.b16 %v38
  %v117 = vunpack.c.l.b16 %v39
  %v118 = vunpack.c.l.b16 %v40
  %v119 = vunpack.c.l.b16 %v41
  %v120 = vunpack.c.l.b16 %v42
  %v121 = vunpack.c.l.b16 %v43
  %v122 = vunpack.c.l.b16 %v44
  %v123 = vunpack.c.l.b16 %v45
  %v124 = vunpack.c.l.b16 %v46
  %v125 = vunpack.c.l.b16 %v47
  %v126 = vunpack.c.l.b16 %v48
  %v127 = vunpack.c.l.b16 %v49
  %v128 = vunpack.c.l.b16 %v50
  %v129 = vpack.c.b16 %v98, %v97
  %v130 = vpack.c.b16 %v100, %v99
  %v131 = vpack.c.b16 %v102, %v101
  %v132 = vpack.c.b16 %v104, %v103
  %v133 = vpack.c.b16 %v106, %v105
  %v134 = vpack.c.b16 %v108, %v107
  %v135 = vpack.c.b16 %v110, %v109
  %v136 = vpack.c.b16 %v112, %v111
  %v137 = vpack.c.b16 %v114, %v113
  %v138 = vpack.c.b16 %v116, %v115
  %v139 = vpack.c.b16 %v118, %v117
  %v140 = vpack.c.b16 %v120, %v119
  %v141 = vpack.c.b16 %v122, %v121
  %v142 = vpack.c.b16 %v124, %v123
  %v143 = vpack.c.b16 %v126, %v125
  %v144 = vpack.c.b16 %v128, %v127
  %161 = vmatpush.bf16.msra.mxu0 %v136
  %162 = vmatpush.bf16.msra.mxu0 %v135
  %163 = vmatpush.bf16.msra.mxu0 %v134
  %164 = vmatpush.bf16.msra.mxu0 %v133
  %165 = vmatpush.bf16.msra.mxu0 %v132
  %166 = vmatpush.bf16.msra.mxu0 %v131
  %167 = vmatpush.bf16.msra.mxu0 %v130
  %168 = vmatpush.bf16.msra.mxu0 %v129
  %169 = vmatmul.bf16.gmra.mxu0 %v61
  %v170 = vpop.f32.mrf.mxu0
  %v171 = vadd.f32 %v53, %v170
  %v172 = vpop.f32.mrf.mxu0
  %v173 = vadd.f32 %v53, %v172
  %174 = vdwg.mxu0
  %175 = vmatpush.bf16.msra.mxu0 %v144
  %176 = vmatpush.bf16.msra.mxu0 %v143
  %177 = vmatpush.bf16.msra.mxu0 %v142
  %178 = vmatpush.bf16.msra.mxu0 %v141
  %179 = vmatpush.bf16.msra.mxu0 %v140
  %180 = vmatpush.bf16.msra.mxu0 %v139
  %181 = vmatpush.bf16.msra.mxu0 %v138
  %182 = vmatpush.bf16.msra.mxu0 %v137
  %183 = vmatmul.bf16.gmra.mxu0 %v62
  %v184 = vpop.f32.mrf.mxu0
  %v185 = vadd.f32 %v171, %v184
  %v186 = vpop.f32.mrf.mxu0
  %v187 = vadd.f32 %v173, %v186
  %188 = vdwg.mxu0
  %v189 = vmul.f32 %v185, 0.5
  %v190 = vmul.f32 %v187, 0.5
  %v191 = vmul.f32 %v185, 0.70710677
  %v192 = vmul.f32 %v187, 0.70710677
  %v193 = vmul.f32 %v191, %v191
  %v194 = vmin.f32 16.0, %v193
  %v195 = vmul.f32 %v194, 2.1237322e-06
  %v196 = vadd.f32 %v195, 0.00028619796
  %v197 = vmul.f32 %v194, %v196
  %v198 = vadd.f32 %v197, 0.0036580483
  %v199 = vmul.f32 %v194, %v198
  %v200 = vadd.f32 %v199, 0.05243302
  %v201 = vmul.f32 %v194, %v200
  %v202 = vadd.f32 %v201, 0.18741608
  %v203 = vmul.f32 %v194, %v202
  %v204 = vadd.f32 %v203, 1.1283791
  %v205 = vmul.f32 %v191, %v204
  %v206 = vmul.f32 %v194, 3.8918573e-05
  %v207 = vadd.f32 %v206, 0.001143296
  %v208 = vmul.f32 %v194, %v207
  %v209 = vadd.f32 %v208, 0.014752088
  %v210 = vmul.f32 %v194, %v209
  %v211 = vadd.f32 %v210, 0.112945676
  %v212 = vmul.f32 %v194, %v211
  %v213 = vadd.f32 %v212, 0.4994258
  %v214 = vmul.f32 %v194, %v213
  %v215 = vadd.f32 %v214, 1.0
  %v216 = vrcp.pop %v215
  %v217 = vmul.f32 %v215, %v216
  %v218 = vsub.f32 1.0, %v217
  %v219 = vmul.f32 %v216, %v218
  %v220 = vadd.f32 %v216, %v219
  %vm221 = vweird.f32 %v215
  %vm222 = vweird.f32 %v216
  %vm223 = vmor %vm221, %vm222
  %v224 = vsel %vm223, %v216, %v220
  %v225 = vand.u32 2147483647, %v215
  %vm226 = vcmp.eq.f32.partialorder %v225, 8.507059e+37
  %v227 = vand.u32 %v215, 2147483648
  %v228 = vor.u32 1.1754944e-38, %v227
  %v229 = vsel %vm226, %v228, %v224
  %v230 = vmul.f32 %v205, %v229
  %v231 = vmin.f32 %v230, 1.0
  %v232 = vmax.f32 %v231, -1.0
  %v233 = vmul.f32 %v192, %v192
  %v234 = vmin.f32 16.0, %v233
  %v235 = vmul.f32 %v234, 2.1237322e-06
  %v236 = vadd.f32 %v235, 0.00028619796
  %v237 = vmul.f32 %v234, %v236
  %v238 = vadd.f32 %v237, 0.0036580483
  %v239 = vmul.f32 %v234, %v238
  %v240 = vadd.f32 %v239, 0.05243302
  %v241 = vmul.f32 %v234, %v240
  %v242 = vadd.f32 %v241, 0.18741608
  %v243 = vmul.f32 %v234, %v242
  %v244 = vadd.f32 %v243, 1.1283791
  %v245 = vmul.f32 %v192, %v244
  %v246 = vmul.f32 %v234, 3.8918573e-05
  %v247 = vadd.f32 %v246, 0.001143296
  %v248 = vmul.f32 %v234, %v247
  %v249 = vadd.f32 %v248, 0.014752088
  %v250 = vmul.f32 %v234, %v249
  %v251 = vadd.f32 %v250, 0.112945676
  %v252 = vmul.f32 %v234, %v251
  %v253 = vadd.f32 %v252, 0.4994258
  %v254 = vmul.f32 %v234, %v253
  %v255 = vadd.f32 %v254, 1.0
  %v256 = vrcp.pop %v255
  %v257 = vmul.f32 %v255, %v256
  %v258 = vsub.f32 1.0, %v257
  %v259 = vmul.f32 %v256, %v258
  %v260 = vadd.f32 %v256, %v259
  %vm261 = vweird.f32 %v255
  %vm262 = vweird.f32 %v256
  %vm263 = vmor %vm261, %vm262
  %v264 = vsel %vm263, %v256, %v260
  %v265 = vand.u32 2147483647, %v255
  %vm266 = vcmp.eq.f32.partialorder %v265, 8.507059e+37
  %v267 = vand.u32 %v255, 2147483648
  %v268 = vor.u32 1.1754944e-38, %v267
  %v269 = vsel %vm266, %v268, %v264
  %v270 = vmul.f32 %v245, %v269
  %v271 = vmin.f32 %v270, 1.0
  %v272 = vmax.f32 %v271, -1.0
  %v273 = vadd.f32 %v232, 1.0
  %v274 = vadd.f32 %v272, 1.0
  %v275 = vmul.f32 %v189, %v273
  %v276 = vmul.f32 %v190, %v274
  %v277 = vpack.c.bf16 %v275, %v275
  %v278 = vpack.c.bf16 %v276, %v276
  %279 = vst [vmem:[%s3] sm:$0xf] %v277
  %280 = vst [vmem:[%s3 + $0x4] sm:$0xf] %v278
  %p281 = scmp.ne.s32.totalorder 0, 0
  // Predicated region
  $region14: #{patch_embedding_conv.1} parent=0 // pred_check
    %p282 = pneg %p281
  $region15: #{patch_embedding_conv.1} parent=0 // pred_check_branch
    %284 = sbr.rel (%p282) target = $region17
  $region16: #{patch_embedding_conv.1} parent=0 // pred_region
    %v285 = vadd.f32 %v275, %v276
    %286 = vst [vmem:[%s4] sm:$0xff] %v285
    %v287 = vmul.f32 %v275, %v275
    %v288 = vmul.f32 %v276, %v276
    %v289 = vadd.f32 %v287, %v288
    %290 = vst [vmem:[%s5] sm:$0xff] %v289
  $region17: #{patch_embedding_conv.1} parent=0 // pred_fallthru
    _
  %p291 = scmp.eq.s32.totalorder 0, 0
  // Predicated region
  $region18: #{patch_embedding_conv.1} parent=0 // pred_check
    %p292 = pneg %p291
  $region19: #{patch_embedding_conv.1} parent=0 // pred_check_branch
    %294 = sbr.rel (%p292) target = $region21
  $region20: #{patch_embedding_conv.1} parent=0 // pred_region
    %v295 = vlaneseq
    %v296 = vshrl.u32 %v295, 7
    %v297 = vadd.s32 %v296, 8
    %vm298 = vcmp.lt.s32.totalorder %v296, 8
    %vm299 = vcmp.lt.s32.totalorder %v297, 8
    %v300 = vsel %vm298, 1, 0
    %v301 = vsel %vm299, 1, 0
    %vm302 = vcmp.eq.s32.totalorder %v300, 1
    %vm303 = vcmp.eq.s32.totalorder %v301, 1
    %v304 = vsel %vm302, %v275, 0.0
    %v305 = vsel %vm303, %v276, 0.0
    %v306 = vadd.f32 %v304, %v305
    %307 = vst [vmem:[%s4] sm:$0xff] %v306
    %v308 = vmul.f32 %v304, %v304
    %v309 = vmul.f32 %v305, %v305
    %v310 = vadd.f32 %v308, %v309
    %311 = vst [vmem:[%s5] sm:$0xff] %v310
  $region21: #{patch_embedding_conv.1} parent=0 // pred_fallthru
    _
  // Predicated region
  $region22: #{patch_embedding_conv.1} parent=0 // pred_check
    _
  $region23: #{patch_embedding_conv.1} parent=0 // pred_check_branch
    %313 = sbr.rel (0) target = $region25
  $region24: #{patch_embedding_conv.1} parent=0 // pred_region
    _
  $region25: #{patch_embedding_conv.1} parent=0 // pred_fallthru
    _
  // Predicated region
  $region26: #{patch_embedding_conv.1} parent=0 // pred_check
    _
  $region27: #{patch_embedding_conv.1} parent=0 // pred_check_branch
    %315 = sbr.rel (0) target = $region29
  $region28: #{patch_embedding_conv.1} parent=0 // pred_region
    _
  $region29: #{patch_embedding_conv.1} parent=0 // pred_fallthru
    _
  // Predicated region
  $region30: #{patch_embedding_conv.1} parent=0 // pred_check
    _
  $region31: #{patch_embedding_conv.1} parent=0 // pred_check_branch
    %317 = sbr.rel (0) target = $region33
  $region32: #{patch_embedding_conv.1} parent=0 // pred_region
    _
  $region33: #{patch_embedding_conv.1} parent=0 // pred_fallthru
    _
  // Predicated region
  $region34: #{patch_embedding_conv.1} parent=0 // pred_check
    _
  $region35: #{patch_embedding_conv.1} parent=0 // pred_check_branch
    %319 = sbr.rel (0) target = $region37
  $region36: #{patch_embedding_conv.1} parent=0 // pred_region
    _
  $region37: #{patch_embedding_conv.1} parent=0 // pred_fallthru
    _
  // Predicated region
  $region38: #{patch_embedding_conv.1} parent=0 // pred_check
    _
  $region39: #{patch_embedding_conv.1} parent=0 // pred_check_branch
    %321 = sbr.rel (0) target = $region41
  $region40: #{patch_embedding_conv.1} parent=0 // pred_region
    _
  $region41: #{patch_embedding_conv.1} parent=0 // pred_fallthru
    _
  // Predicated region
  $region42: #{patch_embedding_conv.1} parent=0 // pred_check
    _
  $region43: #{patch_embedding_conv.1} parent=0 // pred_check_branch
    %323 = sbr.rel (0) target = $region45
  $region44: #{patch_embedding_conv.1} parent=0 // pred_region
    _
  $region45: #{patch_embedding_conv.1} parent=0 // pred_fallthru
    _

</llo_original>
